<compile_context>
chip_gen: v5e
topology: v5e:2x2
jax: 0.10.0
libtpu: 0.0.40
codegen_flags: <defaults>
</compile_context>

<pallas_src>
import math

import jax
import jax.numpy as jnp
from jax.experimental import pallas as pl
from jax.experimental.pallas import tpu as pltpu

LANES = 128
SUBLANES = 8
NUM_SUMS = 8   # |d1|, d1, d1^2, min(y1,0), |d2|, d2, d2^2, min(y2,0)


def _psum(x):
    """(tile_rows, 128) f32 -> (8, 128) sublane/lane-preserving partial sum."""
    return jnp.sum(x.reshape(-1, SUBLANES, LANES), axis=0)


def _loss_kernel(y1_ref, y2_ref, l_ref, out_ref):
    i = pl.program_id(1)   # reduction step (grid axis 0 is the core split)

    @pl.when(i == 0)
    def _():
        out_ref[...] = jnp.zeros_like(out_ref)

    y1 = y1_ref[...].astype(jnp.float32)
    y2 = y2_ref[...].astype(jnp.float32)
    lb = l_ref[...].astype(jnp.float32)
    d1 = y1 - lb
    d2 = y2 - lb

    parts = (
        jnp.abs(d1), d1, d1 * d1, jnp.minimum(y1, 0.0),
        jnp.abs(d2), d2, d2 * d2, jnp.minimum(y2, 0.0),
    )
    for k, p in enumerate(parts):
        out_ref[SUBLANES * k:SUBLANES * (k + 1), :] += _psum(p)


def docunet_loss_b(y1, y2, label, r=0.1, *, tile_rows=1024):
    """Pallas implementation of DocUnetLossB.forward. Returns a scalar f32."""
    assert y1.shape == label.shape and y2.shape == label.shape

    total = math.prod(y1.shape)
    rows_true = pl.cdiv(total, LANES)

    # Shrink the tile for small inputs (bounds zero-padding); keep it a
    # multiple of 16 so bf16 inputs stay sublane-packed.
    half_rows = pl.cdiv(rows_true, 2)
    tile_rows = int(max(16, min(int(tile_rows), pl.cdiv(half_rows, 16) * 16)))

    n_tiles = int(pl.cdiv(rows_true, 2 * tile_rows))   # tiles per core-half
    rows_padded = 2 * n_tiles * tile_rows
    padded_total = rows_padded * LANES

    def _prep(x):
        flat = x.reshape(-1)
        if padded_total > total:
            flat = jnp.pad(flat, (0, padded_total - total))
        return flat.reshape(rows_padded, LANES)

    y1p, y2p, lp = _prep(y1), _prep(y2), _prep(label)

    in_spec = pl.BlockSpec((tile_rows, LANES),
                           lambda c, i: (c * n_tiles + i, 0))

    out = pl.pallas_call(
        _loss_kernel,
        out_shape=jax.ShapeDtypeStruct((2 * NUM_SUMS * SUBLANES, LANES),
                                       jnp.float32),
        grid_spec=pltpu.PrefetchScalarGridSpec(
            num_scalar_prefetch=0,
            grid=(2, n_tiles),
            in_specs=[in_spec, in_spec, in_spec],
            out_specs=pl.BlockSpec((NUM_SUMS * SUBLANES, LANES),
                                   lambda c, i: (c, 0)),
        ),
        compiler_params=pltpu.CompilerParams(
            dimension_semantics=("parallel", "arbitrary"),
            vmem_limit_bytes=32 * 1024 * 1024,
        ),
    )(y1p, y2p, lp)

    # Combine 2 (cores) x 8 (sums) x 8 (sublanes) x 128 (lanes) partials.
    sums = out.reshape(2, NUM_SUMS, SUBLANES, LANES).sum(axis=(0, 2, 3))
    inv_n = 1.0 / float(total)   # true N, so zero-padding stays exact

    sum_abs1, sum_d1, sum_sq1, sum_min1 = sums[0], sums[1], sums[2], sums[3]
    sum_abs2, sum_d2, sum_sq2, sum_min2 = sums[4], sums[5], sums[6], sums[7]

    lossf1 = sum_abs1 * inv_n - r * jnp.abs(sum_d1 * inv_n)
    lossb1 = sum_min1 * inv_n
    lossf2 = sum_abs2 * inv_n - r * jnp.abs(sum_d2 * inv_n)
    lossb2 = sum_min2 * inv_n
    mse1 = sum_sq1 * inv_n
    mse2 = sum_sq2 * inv_n
    return mse1 + lossf1 + lossb1 + mse2 + lossf2 + lossb2


def _reference_loss(y1, y2, label, r=0.1):
    y1 = y1.astype(jnp.float32)
    y2 = y2.astype(jnp.float32)
    label = label.astype(jnp.float32)
    d1 = y1 - label
    lossf1 = jnp.mean(jnp.abs(d1)) - r * jnp.abs(jnp.mean(d1))
    lossb1 = jnp.mean(jnp.minimum(y1, 0.0))
    d2 = y2 - label
    lossf2 = jnp.mean(jnp.abs(d2)) - r * jnp.abs(jnp.mean(d2))
    lossb2 = jnp.mean(jnp.minimum(y2, 0.0))
    return (jnp.mean(d1 * d1) + lossf1 + lossb1 +
            jnp.mean(d2 * d2) + lossf2 + lossb2)


if __name__ == "__main__":
    key = jax.random.PRNGKey(0)
    k1, k2, k3 = jax.random.split(key, 3)
    shape = (2, 4, 16, 16)      # NCHW, same convention as the PyTorch module
    y1 = jax.random.normal(k1, shape, dtype=jnp.float32)
    y2 = jax.random.normal(k2, shape, dtype=jnp.float32)
    label = jax.random.normal(k3, shape, dtype=jnp.float32)

    loss = jax.block_until_ready(docunet_loss_b(y1, y2, label, r=0.1))
    ref = jax.block_until_ready(_reference_loss(y1, y2, label, r=0.1))

    assert jnp.allclose(loss, ref, rtol=1e-5, atol=1e-5), (loss, ref)
    print("KERNEL_OK")
</pallas_src>

<mosaic_0001>
module attributes {stable_mosaic.version = 11 : i64} {
  func.func @_loss_kernel(%arg0: i32, %arg1: i32, %arg2: memref<16x128xf32, #tpu.memory_space<vmem>>, %arg3: memref<16x128xf32, #tpu.memory_space<vmem>>, %arg4: memref<16x128xf32, #tpu.memory_space<vmem>>, %arg5: memref<64x128xf32, #tpu.memory_space<vmem>>) attributes {dimension_semantics = [#tpu.dimension_semantics<parallel>, #tpu.dimension_semantics<arbitrary>], iteration_bounds = array<i64: 2, 1>, scalar_prefetch = 0 : i64, scratch_operands = 0 : i64, tpu.core_type = #tpu.core_type<tc>, window_params = [{transform_indices = @transform_0, window_bounds = array<i64: 16, 128>}, {transform_indices = @transform_1, window_bounds = array<i64: 16, 128>}, {transform_indices = @transform_2, window_bounds = array<i64: 16, 128>}, {transform_indices = @transform_3, window_bounds = array<i64: 64, 128>}]} {
    %c0_i32 = arith.constant 0 : i32
    %0 = arith.cmpi eq, %arg1, %c0_i32 : i32
    %1 = arith.extui %0 : i1 to i32
    %c0_i32_0 = arith.constant 0 : i32
    %2 = arith.cmpi ne, %1, %c0_i32_0 : i32
    scf.if %2 {
      %cst_40 = arith.constant 0.000000e+00 : f32
      %56 = vector.broadcast %cst_40 : f32 to vector<64x128xf32>
      %c0_41 = arith.constant 0 : index
      %c0_42 = arith.constant 0 : index
      %57 = vector.load %arg5[%c0_41, %c0_42] : memref<64x128xf32, #tpu.memory_space<vmem>>, vector<64x128xf32>
      tpu.vector_store %arg5[%c0_41, %c0_42], %56 {strides = array<i32>} : memref<64x128xf32, #tpu.memory_space<vmem>>, vector<64x128xf32>,
    } else {
    }
    %c0 = arith.constant 0 : index
    %c0_1 = arith.constant 0 : index
    %3 = vector.load %arg2[%c0, %c0_1] : memref<16x128xf32, #tpu.memory_space<vmem>>, vector<16x128xf32>
    %c0_2 = arith.constant 0 : index
    %c0_3 = arith.constant 0 : index
    %4 = vector.load %arg3[%c0_2, %c0_3] : memref<16x128xf32, #tpu.memory_space<vmem>>, vector<16x128xf32>
    %c0_4 = arith.constant 0 : index
    %c0_5 = arith.constant 0 : index
    %5 = vector.load %arg4[%c0_4, %c0_5] : memref<16x128xf32, #tpu.memory_space<vmem>>, vector<16x128xf32>
    %6 = arith.subf %3, %5 : vector<16x128xf32>
    %7 = arith.subf %4, %5 : vector<16x128xf32>
    %8 = math.absf %6 : vector<16x128xf32>
    %9 = arith.mulf %6, %6 : vector<16x128xf32>
    %cst = arith.constant 0.000000e+00 : f32
    %10 = vector.broadcast %cst : f32 to vector<16x128xf32>
    %11 = arith.minimumf %3, %10 : vector<16x128xf32>
    %12 = math.absf %7 : vector<16x128xf32>
    %13 = arith.mulf %7, %7 : vector<16x128xf32>
    %cst_6 = arith.constant 0.000000e+00 : f32
    %14 = vector.broadcast %cst_6 : f32 to vector<16x128xf32>
    %15 = arith.minimumf %4, %14 : vector<16x128xf32>
    %c0_7 = arith.constant 0 : index
    %c0_8 = arith.constant 0 : index
    %16 = vector.load %arg5[%c0_7, %c0_8] : memref<64x128xf32, #tpu.memory_space<vmem>>, vector<8x128xf32>
    %17 = vector.shape_cast %8 : vector<16x128xf32> to vector<2x8x128xf32>
    %cst_9 = arith.constant dense<0.000000e+00> : vector<8x128xf32>
    %18 = vector.multi_reduction <add>, %17, %cst_9 [0] : vector<2x8x128xf32> to vector<8x128xf32>
    %19 = arith.addf %16, %18 : vector<8x128xf32>
    %c0_10 = arith.constant 0 : index
    %c0_11 = arith.constant 0 : index
    %20 = vector.load %arg5[%c0_10, %c0_11] : memref<64x128xf32, #tpu.memory_space<vmem>>, vector<8x128xf32>
    tpu.vector_store %arg5[%c0_10, %c0_11], %19 {strides = array<i32>} : memref<64x128xf32, #tpu.memory_space<vmem>>, vector<8x128xf32>,
    %c8 = arith.constant 8 : index
    %c0_12 = arith.constant 0 : index
    %21 = vector.load %arg5[%c8, %c0_12] : memref<64x128xf32, #tpu.memory_space<vmem>>, vector<8x128xf32>
    %22 = vector.shape_cast %6 : vector<16x128xf32> to vector<2x8x128xf32>
    %cst_13 = arith.constant dense<0.000000e+00> : vector<8x128xf32>
    %23 = vector.multi_reduction <add>, %22, %cst_13 [0] : vector<2x8x128xf32> to vector<8x128xf32>
    %24 = arith.addf %21, %23 : vector<8x128xf32>
    %c8_14 = arith.constant 8 : index
    %c0_15 = arith.constant 0 : index
    %25 = vector.load %arg5[%c8_14, %c0_15] : memref<64x128xf32, #tpu.memory_space<vmem>>, vector<8x128xf32>
    tpu.vector_store %arg5[%c8_14, %c0_15], %24 {strides = array<i32>} : memref<64x128xf32, #tpu.memory_space<vmem>>, vector<8x128xf32>,
    %c16 = arith.constant 16 : index
    %c0_16 = arith.constant 0 : index
    %26 = vector.load %arg5[%c16, %c0_16] : memref<64x128xf32, #tpu.memory_space<vmem>>, vector<8x128xf32>
    %27 = vector.shape_cast %9 : vector<16x128xf32> to vector<2x8x128xf32>
    %cst_17 = arith.constant dense<0.000000e+00> : vector<8x128xf32>
    %28 = vector.multi_reduction <add>, %27, %cst_17 [0] : vector<2x8x128xf32> to vector<8x128xf32>
    %29 = arith.addf %26, %28 : vector<8x128xf32>
    %c16_18 = arith.constant 16 : index
    %c0_19 = arith.constant 0 : index
    %30 = vector.load %arg5[%c16_18, %c0_19] : memref<64x128xf32, #tpu.memory_space<vmem>>, vector<8x128xf32>
    tpu.vector_store %arg5[%c16_18, %c0_19], %29 {strides = array<i32>} : memref<64x128xf32, #tpu.memory_space<vmem>>, vector<8x128xf32>,
    %c24 = arith.constant 24 : index
    %c0_20 = arith.constant 0 : index
    %31 = vector.load %arg5[%c24, %c0_20] : memref<64x128xf32, #tpu.memory_space<vmem>>, vector<8x128xf32>
    %32 = vector.shape_cast %11 : vector<16x128xf32> to vector<2x8x128xf32>
    %cst_21 = arith.constant dense<0.000000e+00> : vector<8x128xf32>
    %33 = vector.multi_reduction <add>, %32, %cst_21 [0] : vector<2x8x128xf32> to vector<8x128xf32>
    %34 = arith.addf %31, %33 : vector<8x128xf32>
    %c24_22 = arith.constant 24 : index
    %c0_23 = arith.constant 0 : index
    %35 = vector.load %arg5[%c24_22, %c0_23] : memref<64x128xf32, #tpu.memory_space<vmem>>, vector<8x128xf32>
    tpu.vector_store %arg5[%c24_22, %c0_23], %34 {strides = array<i32>} : memref<64x128xf32, #tpu.memory_space<vmem>>, vector<8x128xf32>,
    %c32 = arith.constant 32 : index
    %c0_24 = arith.constant 0 : index
    %36 = vector.load %arg5[%c32, %c0_24] : memref<64x128xf32, #tpu.memory_space<vmem>>, vector<8x128xf32>
    %37 = vector.shape_cast %12 : vector<16x128xf32> to vector<2x8x128xf32>
    %cst_25 = arith.constant dense<0.000000e+00> : vector<8x128xf32>
    %38 = vector.multi_reduction <add>, %37, %cst_25 [0] : vector<2x8x128xf32> to vector<8x128xf32>
    %39 = arith.addf %36, %38 : vector<8x128xf32>
    %c32_26 = arith.constant 32 : index
    %c0_27 = arith.constant 0 : index
    %40 = vector.load %arg5[%c32_26, %c0_27] : memref<64x128xf32, #tpu.memory_space<vmem>>, vector<8x128xf32>
    tpu.vector_store %arg5[%c32_26, %c0_27], %39 {strides = array<i32>} : memref<64x128xf32, #tpu.memory_space<vmem>>, vector<8x128xf32>,
    %c40 = arith.constant 40 : index
    %c0_28 = arith.constant 0 : index
    %41 = vector.load %arg5[%c40, %c0_28] : memref<64x128xf32, #tpu.memory_space<vmem>>, vector<8x128xf32>
    %42 = vector.shape_cast %7 : vector<16x128xf32> to vector<2x8x128xf32>
    %cst_29 = arith.constant dense<0.000000e+00> : vector<8x128xf32>
    %43 = vector.multi_reduction <add>, %42, %cst_29 [0] : vector<2x8x128xf32> to vector<8x128xf32>
    %44 = arith.addf %41, %43 : vector<8x128xf32>
    %c40_30 = arith.constant 40 : index
    %c0_31 = arith.constant 0 : index
    %45 = vector.load %arg5[%c40_30, %c0_31] : memref<64x128xf32, #tpu.memory_space<vmem>>, vector<8x128xf32>
    tpu.vector_store %arg5[%c40_30, %c0_31], %44 {strides = array<i32>} : memref<64x128xf32, #tpu.memory_space<vmem>>, vector<8x128xf32>,
    %c48 = arith.constant 48 : index
    %c0_32 = arith.constant 0 : index
    %46 = vector.load %arg5[%c48, %c0_32] : memref<64x128xf32, #tpu.memory_space<vmem>>, vector<8x128xf32>
    %47 = vector.shape_cast %13 : vector<16x128xf32> to vector<2x8x128xf32>
    %cst_33 = arith.constant dense<0.000000e+00> : vector<8x128xf32>
    %48 = vector.multi_reduction <add>, %47, %cst_33 [0] : vector<2x8x128xf32> to vector<8x128xf32>
    %49 = arith.addf %46, %48 : vector<8x128xf32>
    %c48_34 = arith.constant 48 : index
    %c0_35 = arith.constant 0 : index
    %50 = vector.load %arg5[%c48_34, %c0_35] : memref<64x128xf32, #tpu.memory_space<vmem>>, vector<8x128xf32>
    tpu.vector_store %arg5[%c48_34, %c0_35], %49 {strides = array<i32>} : memref<64x128xf32, #tpu.memory_space<vmem>>, vector<8x128xf32>,
    %c56 = arith.constant 56 : index
    %c0_36 = arith.constant 0 : index
    %51 = vector.load %arg5[%c56, %c0_36] : memref<64x128xf32, #tpu.memory_space<vmem>>, vector<8x128xf32>
    %52 = vector.shape_cast %15 : vector<16x128xf32> to vector<2x8x128xf32>
    %cst_37 = arith.constant dense<0.000000e+00> : vector<8x128xf32>
    %53 = vector.multi_reduction <add>, %52, %cst_37 [0] : vector<2x8x128xf32> to vector<8x128xf32>
    %54 = arith.addf %51, %53 : vector<8x128xf32>
    %c56_38 = arith.constant 56 : index
    %c0_39 = arith.constant 0 : index
    %55 = vector.load %arg5[%c56_38, %c0_39] : memref<64x128xf32, #tpu.memory_space<vmem>>, vector<8x128xf32>
    tpu.vector_store %arg5[%c56_38, %c0_39], %54 {strides = array<i32>} : memref<64x128xf32, #tpu.memory_space<vmem>>, vector<8x128xf32>,
    return
  }
  func.func @transform_0(%arg0: i32, %arg1: i32) -> (i32, i32) {
    %c1_i32 = arith.constant 1 : i32
    %0 = arith.muli %arg0, %c1_i32 : i32
    %1 = arith.addi %0, %arg1 : i32
    %c0_i32 = arith.constant 0 : i32
    %c0_i32_0 = arith.constant 0 : i32
    return %1, %c0_i32 : i32, i32
  }
  func.func @transform_1(%arg0: i32, %arg1: i32) -> (i32, i32) {
    %c1_i32 = arith.constant 1 : i32
    %0 = arith.muli %arg0, %c1_i32 : i32
    %1 = arith.addi %0, %arg1 : i32
    %c0_i32 = arith.constant 0 : i32
    %c0_i32_0 = arith.constant 0 : i32
    return %1, %c0_i32 : i32, i32
  }
  func.func @transform_2(%arg0: i32, %arg1: i32) -> (i32, i32) {
    %c1_i32 = arith.constant 1 : i32
    %0 = arith.muli %arg0, %c1_i32 : i32
    %1 = arith.addi %0, %arg1 : i32
    %c0_i32 = arith.constant 0 : i32
    %c0_i32_0 = arith.constant 0 : i32
    return %1, %c0_i32 : i32, i32
  }
  func.func @transform_3(%arg0: i32, %arg1: i32) -> (i32, i32) {
    %c0_i32 = arith.constant 0 : i32
    %c0_i32_0 = arith.constant 0 : i32
    return %arg0, %c0_i32 : i32, i32
  }
}

</mosaic_0001>

<llo_original>
// kernel: tpu_custom_call.1
$region0: #{tpu_custom_call.1}
  #allocation0 [shape = 'u32[]', space=smem, size = 0x4, offset = 0x4, fixed_abs, tag = 'smem constant byte address 0x4 - core index']
  #allocation1 [shape = 'u32[72,128]{1,0:T(1,128)}', space=vmem, size = 0x9000, scoped, tag = 'internal scratch']
  %s0 = inlined_call_operand.hbm [shape: f32[32,128], index: 0, kind: input, shape index: {}]
  %s1 = inlined_call_operand.hbm [shape: f32[32,128], index: 1, kind: input, shape index: {}]
  %s2 = inlined_call_operand.hbm [shape: f32[32,128], index: 2, kind: input, shape index: {}]
  %s3 = inlined_call_operand.hbm [shape: f32[128,128], index: 3, kind: output, shape index: {}]
  %s4 = sld [smem:[#allocation0]]
  $region61: #{tpu_custom_call.1} parent=0
    _
  %s6 = ssub.s32 1, %s4
  %s7 = scalar_select 0, %s6, %s4
  $region1: #{tpu_custom_call.1} parent=0
    #allocation2 [shape = 'u8[16384]{0}', space=vmem, size = 0x4000, scoped, tag = 'input window, operand 0']
    #allocation3 [shape = 's32[2]{0}', space=sflag, size = 0x8, scoped, tag = 'scoped memory for tpu_custom_call.1']
    #allocation4 [shape = 's32[2]{0}', space=sflag, size = 0x8, scoped, tag = 'scoped memory for tpu_custom_call.1']
    #allocation5 [shape = 'u8[16384]{0}', space=vmem, size = 0x4000, scoped, tag = 'input window, operand 1']
    #allocation6 [shape = 's32[2]{0}', space=sflag, size = 0x8, scoped, tag = 'scoped memory for tpu_custom_call.1']
    #allocation7 [shape = 'u8[16384]{0}', space=vmem, size = 0x4000, scoped, tag = 'input window, operand 2']
    #allocation8 [shape = 'u8[65536]{0}', space=vmem, size = 0x10000, scoped, tag = 'output window, operand 0']
    %8 = vsyncpa [#allocation3], 0
    %s9 = scalar_lea.sflag [#allocation3], 1
    %10 = vsyncpa %s9, 0
    %11 = vsyncpa [#allocation6], 0
    %s12 = scalar_lea.sflag [#allocation6], 1
    %13 = vsyncpa %s12, 0
    %14 = vsyncpa [#allocation4], 0
    %s15 = scalar_lea.sflag [#allocation4], 1
    %16 = vsyncpa %s15, 0
    loop: start=0, step=1, limit=4
    $region2: #{tpu_custom_call.1} parent=1 // loop_pre_header
      _
    $region3: #{tpu_custom_call.1} parent=1 // loop_header
      %s18 = sphi 0, %s22
      %p19 = scmp.ge.s32.totalorder %s18, 4
      %s25 = sphi 0, %s37
      %s26 = sphi 0, %s33
      %s27 = sphi 0, %s25
      %s28 = sphi 0, %s26
      %s29 = sphi 0, %s27
      %s30 = sphi 0, %s28
      %s42 = sphi 0, %s44
      %s45 = sphi 0, %s42
      %s46 = sphi 0, %s45
      %s62 = sphi 0, %s46
      %s70 = sphi 0, %s72
      %s73 = sphi 0, %s70
      %s74 = sphi 0, %s73
      %s90 = sphi 0, %s74
      %s98 = sphi 0, %s100
      %s101 = sphi 0, %s98
      %s102 = sphi 0, %s101
      %s118 = sphi 0, %s102
      %s124 = sphi 0, %s126
      %s127 = sphi 0, %s124
      %s128 = sphi 0, %s127
      %s144 = sphi 0, %s128
    $region4: #{tpu_custom_call.1} parent=1 // loop_header_branch
      %21 = sbr.rel (%p19) target = $region8
    $region5: #{tpu_custom_call.1} parent=1 // loop_body
      %s23 = ssub.s32 %s18, 1
      %s24 = ssub.s32 %s18, 2
      %s31 = sadd.s32 1, %s26
      %p32 = scmp.ge.s32.totalorder %s31, 1
      %s33 = scalar_select %p32, 0, %s31
      %s34 = sadd.s32 1, %s25
      %s35 = scalar_select %p32, %s34, %s25
      %p36 = scmp.ge.s32.totalorder %s35, 2
      %s37 = scalar_select %p36, 0, %s35
      %s38 = sadd.s32 %s25, %s26
      %s39 = sadd.s32 %s37, %s33
      %s40 = ssub.s32 %s38, %s39
      %p41 = scmp.eq.s32.totalorder %s40, 0
      %s43 = sadd.s32 %s42, 1
      %s44 = scalar_select %p41, %s42, %s43
      %p47 = pneg %p41
      %p48 = scmp.eq.s32.totalorder %s18, 1
      %p49 = por %p47, %p48
      %p50 = scmp.ne.s32.totalorder %s42, %s45
      %p51 = scmp.eq.s32.totalorder %s18, 0
      %p52 = por %p50, %p51
      %p53 = scmp.ne.s32.totalorder %s42, %s45
      %p54 = scmp.eq.s32.totalorder %s23, 1
      %p55 = por %p53, %p54
      %p56 = scmp.ne.s32.totalorder %s45, %s46
      %p57 = scmp.eq.s32.totalorder %s23, 0
      %p58 = por %p56, %p57
      %p59 = scmp.ne.s32.totalorder %s45, %s46
      %p60 = scmp.eq.s32.totalorder %s24, 1
      %p61 = por %p59, %p60
      %p63 = scmp.ne.s32.totalorder %s46, %s62
      %p64 = scmp.eq.s32.totalorder %s24, 0
      %p65 = por %p63, %p64
      %s66 = sadd.s32 %s25, %s26
      %s67 = sadd.s32 %s37, %s33
      %s68 = ssub.s32 %s66, %s67
      %p69 = scmp.eq.s32.totalorder %s68, 0
      %s71 = sadd.s32 %s70, 1
      %s72 = scalar_select %p69, %s70, %s71
      %p75 = pneg %p69
      %p76 = scmp.eq.s32.totalorder %s18, 1
      %p77 = por %p75, %p76
      %p78 = scmp.ne.s32.totalorder %s70, %s73
      %p79 = scmp.eq.s32.totalorder %s18, 0
      %p80 = por %p78, %p79
      %p81 = scmp.ne.s32.totalorder %s70, %s73
      %p82 = scmp.eq.s32.totalorder %s23, 1
      %p83 = por %p81, %p82
      %p84 = scmp.ne.s32.totalorder %s73, %s74
      %p85 = scmp.eq.s32.totalorder %s23, 0
      %p86 = por %p84, %p85
      %p87 = scmp.ne.s32.totalorder %s73, %s74
      %p88 = scmp.eq.s32.totalorder %s24, 1
      %p89 = por %p87, %p88
      %p91 = scmp.ne.s32.totalorder %s74, %s90
      %p92 = scmp.eq.s32.totalorder %s24, 0
      %p93 = por %p91, %p92
      %s94 = sadd.s32 %s25, %s26
      %s95 = sadd.s32 %s37, %s33
      %s96 = ssub.s32 %s94, %s95
      %p97 = scmp.eq.s32.totalorder %s96, 0
      %s99 = sadd.s32 %s98, 1
      %s100 = scalar_select %p97, %s98, %s99
      %p103 = pneg %p97
      %p104 = scmp.eq.s32.totalorder %s18, 1
      %p105 = por %p103, %p104
      %p106 = scmp.ne.s32.totalorder %s98, %s101
      %p107 = scmp.eq.s32.totalorder %s18, 0
      %p108 = por %p106, %p107
      %p109 = scmp.ne.s32.totalorder %s98, %s101
      %p110 = scmp.eq.s32.totalorder %s23, 1
      %p111 = por %p109, %p110
      %p112 = scmp.ne.s32.totalorder %s101, %s102
      %p113 = scmp.eq.s32.totalorder %s23, 0
      %p114 = por %p112, %p113
      %p115 = scmp.ne.s32.totalorder %s101, %s102
      %p116 = scmp.eq.s32.totalorder %s24, 1
      %p117 = por %p115, %p116
      %p119 = scmp.ne.s32.totalorder %s102, %s118
      %p120 = scmp.eq.s32.totalorder %s24, 0
      %p121 = por %p119, %p120
      %s122 = ssub.s32 %s25, %s37
      %p123 = scmp.eq.s32.totalorder %s122, 0
      %s125 = sadd.s32 %s124, 1
      %s126 = scalar_select %p123, %s124, %s125
      %p129 = pneg %p123
      %p130 = scmp.eq.s32.totalorder %s18, 1
      %p131 = por %p129, %p130
      %p132 = scmp.ne.s32.totalorder %s124, %s127
      %p133 = scmp.eq.s32.totalorder %s18, 0
      %p134 = por %p132, %p133
      %p135 = scmp.ne.s32.totalorder %s124, %s127
      %p136 = scmp.eq.s32.totalorder %s23, 1
      %p137 = por %p135, %p136
      %p138 = scmp.ne.s32.totalorder %s127, %s128
      %p139 = scmp.eq.s32.totalorder %s23, 0
      %p140 = por %p138, %p139
      %p141 = scmp.ne.s32.totalorder %s127, %s128
      %p142 = scmp.eq.s32.totalorder %s24, 1
      %p143 = por %p141, %p142
      %p145 = scmp.ne.s32.totalorder %s128, %s144
      %p146 = scmp.eq.s32.totalorder %s24, 0
      %p147 = por %p145, %p146
      %p148 = scmp.le.s32.totalorder 1, %s18
      %p149 = scmp.lt.s32.totalorder %s18, 3
      %p150 = pnand %p148, %p149
      %p151 = pneg %p150
      // Predicated region
      $region9: #{tpu_custom_call.1} parent=5 // pred_check
        _
      $region10: #{tpu_custom_call.1} parent=5 // pred_check_branch
        %153 = sbr.rel (%p150) target = $region12
      $region11: #{tpu_custom_call.1} parent=5 // pred_region
        %s154 = ssub.s32 %s18, 1
      $region12: #{tpu_custom_call.1} parent=5 // pred_fallthru
        _
      %p155 = scmp.lt.s32.totalorder %s18, 2
      // Predicated region
      $region13: #{tpu_custom_call.1} parent=5 // pred_check
        %p156 = pneg %p155
      $region14: #{tpu_custom_call.1} parent=5 // pred_check_branch
        %158 = sbr.rel (%p156) target = $region16
      $region15: #{tpu_custom_call.1} parent=5 // pred_region
        // Predicated region
        $region17: #{tpu_custom_call.1} parent=15 // pred_check
          %p159 = pneg %p52
        $region18: #{tpu_custom_call.1} parent=15 // pred_check_branch
          %161 = sbr.rel (%p159) target = $region20
        $region19: #{tpu_custom_call.1} parent=15 // pred_region
          %s162 = sand.u32 %s42, 1
          %s163 = scalar_lea.sflag [#allocation3], %s162
          %s164 = sand.u32 %s42, 1
          %s165 = smul.addr %s164, 16
          %s166 = scalar_lea.vmem [#allocation2], %s165
          %s167 = sadd.s32 %s25, %s26
          %s168 = smul.u32 2, %s167
          %170 = vsyncadd %s163, 0
          %s171 = smul.addr %s168, 8
          %s172 = scalar_lea.hbm %s0, %s171
          %s173 = sshll.u32 %s172, 4
          %s174 = int_to_ptr.hbm [resolvable:$true] %s173
          %s175 = sshll.u32 %s166, 4
          %s176 = int_to_ptr.vmem [resolvable:$true] %s175
          %181 = dma.hbm_to_vmem [thread:$0]  %s174, 256, %s176, %s163, 128, 128, 8
        $region20: #{tpu_custom_call.1} parent=15 // pred_fallthru
          _
        // Predicated region
        $region21: #{tpu_custom_call.1} parent=15 // pred_check
          %p182 = pneg %p80
        $region22: #{tpu_custom_call.1} parent=15 // pred_check_branch
          %184 = sbr.rel (%p182) target = $region24
        $region23: #{tpu_custom_call.1} parent=15 // pred_region
          %s185 = sand.u32 %s18, 1
          %s186 = scalar_lea.sflag [#allocation6], %s185
          %s187 = sand.u32 %s70, 1
          %s188 = smul.addr %s187, 16
          %s189 = scalar_lea.vmem [#allocation5], %s188
          %s190 = sadd.s32 %s25, %s26
          %s191 = smul.u32 2, %s190
          %193 = vsyncadd %s186, 0
          %s194 = smul.addr %s191, 8
          %s195 = scalar_lea.hbm %s1, %s194
          %s196 = sshll.u32 %s195, 4
          %s197 = int_to_ptr.hbm [resolvable:$true] %s196
          %s198 = sshll.u32 %s189, 4
          %s199 = int_to_ptr.vmem [resolvable:$true] %s198
          %204 = dma.hbm_to_vmem [thread:$0]  %s197, 256, %s199, %s186, 128, 128, 8
        $region24: #{tpu_custom_call.1} parent=15 // pred_fallthru
          _
        // Predicated region
        $region25: #{tpu_custom_call.1} parent=15 // pred_check
          %p205 = pneg %p108
        $region26: #{tpu_custom_call.1} parent=15 // pred_check_branch
          %207 = sbr.rel (%p205) target = $region28
        $region27: #{tpu_custom_call.1} parent=15 // pred_region
          %s208 = sand.u32 %s18, 1
          %s209 = scalar_lea.sflag [#allocation6], %s208
          %s210 = sand.u32 %s98, 1
          %s211 = smul.addr %s210, 16
          %s212 = scalar_lea.vmem [#allocation7], %s211
          %s213 = sadd.s32 %s25, %s26
          %s214 = smul.u32 2, %s213
          %216 = vsyncadd %s209, 0
          %s217 = smul.addr %s214, 8
          %s218 = scalar_lea.hbm %s2, %s217
          %s219 = sshll.u32 %s218, 4
          %s220 = int_to_ptr.hbm [resolvable:$true] %s219
          %s221 = sshll.u32 %s212, 4
          %s222 = int_to_ptr.vmem [resolvable:$true] %s221
          %227 = dma.hbm_to_vmem [thread:$0]  %s220, 256, %s222, %s209, 128, 128, 8
        $region28: #{tpu_custom_call.1} parent=15 // pred_fallthru
          _
      $region16: #{tpu_custom_call.1} parent=5 // pred_fallthru
        _
      %p228 = scmp.le.s32.totalorder 1, %s18
      %p229 = scmp.lt.s32.totalorder %s18, 3
      %p230 = pnand %p228, %p229
      %p231 = pneg %p230
      // Predicated region
      $region29: #{tpu_custom_call.1} parent=5 // pred_check
        _
      $region30: #{tpu_custom_call.1} parent=5 // pred_check_branch
        %233 = sbr.rel (%p230) target = $region32
      $region31: #{tpu_custom_call.1} parent=5 // pred_region
        %s234 = ssub.s32 %s18, 1
        %s235 = sand.u32 %s45, 1
        %s236 = scalar_lea.sflag [#allocation3], %s235
        %s237 = sand.u32 %s45, 1
        %s238 = smul.addr %s237, 16
        %s239 = scalar_lea.vmem [#allocation2], %s238
        // Predicated region
        $region33: #{tpu_custom_call.1} parent=31 // pred_check
          %p240 = pneg %p58
        $region34: #{tpu_custom_call.1} parent=31 // pred_check_branch
          %242 = sbr.rel (%p240) target = $region36
        $region35: #{tpu_custom_call.1} parent=31 // pred_region
          %244 = dma.done %s236, 256
        $region36: #{tpu_custom_call.1} parent=31 // pred_fallthru
          _
        %s245 = sand.u32 %s23, 1
        %s246 = scalar_lea.sflag [#allocation6], %s245
        %s247 = sand.u32 %s73, 1
        %s248 = smul.addr %s247, 16
        %s249 = scalar_lea.vmem [#allocation5], %s248
        // Predicated region
        $region37: #{tpu_custom_call.1} parent=31 // pred_check
          %p250 = pneg %p86
        $region38: #{tpu_custom_call.1} parent=31 // pred_check_branch
          %252 = sbr.rel (%p250) target = $region40
        $region39: #{tpu_custom_call.1} parent=31 // pred_region
          %254 = dma.done %s246, 256
        $region40: #{tpu_custom_call.1} parent=31 // pred_fallthru
          _
        %s255 = sand.u32 %s23, 1
        %s256 = scalar_lea.sflag [#allocation6], %s255
        %s257 = sand.u32 %s101, 1
        %s258 = smul.addr %s257, 16
        %s259 = scalar_lea.vmem [#allocation7], %s258
        // Predicated region
        $region41: #{tpu_custom_call.1} parent=31 // pred_check
          %p260 = pneg %p114
        $region42: #{tpu_custom_call.1} parent=31 // pred_check_branch
          %262 = sbr.rel (%p260) target = $region44
        $region43: #{tpu_custom_call.1} parent=31 // pred_region
          %264 = dma.done %s256, 256
        $region44: #{tpu_custom_call.1} parent=31 // pred_fallthru
          _
        %s265 = sand.u32 %s45, 1
        %s266 = scalar_lea.sflag [#allocation3], %s265
        %s267 = sand.u32 %s45, 1
        %s268 = smul.addr %s267, 16
        %s269 = scalar_lea.vmem [#allocation2], %s268
        %p270 = pneg %p58
        %p271 = pneg %p55
        %s272 = sand.u32 %s23, 1
        %s273 = scalar_lea.sflag [#allocation6], %s272
        %s274 = sand.u32 %s73, 1
        %s275 = smul.addr %s274, 16
        %s276 = scalar_lea.vmem [#allocation5], %s275
        %p277 = pneg %p86
        %p278 = pneg %p83
        %s279 = sand.u32 %s23, 1
        %s280 = scalar_lea.sflag [#allocation6], %s279
        %s281 = sand.u32 %s101, 1
        %s282 = smul.addr %s281, 16
        %s283 = scalar_lea.vmem [#allocation7], %s282
        %p284 = pneg %p114
        %p285 = pneg %p111
        %p286 = pneg %p140
        %p287 = pneg %p137
        %s288 = sand.u32 %s127, 1
        %s289 = scalar_lea.sflag [#allocation4], %s288
        %s290 = sand.u32 %s127, 1
        %s291 = smul.addr %s290, 64
        %s292 = scalar_lea.vmem [#allocation8], %s291
        %s293 = sadd.s32 %s27, %s28
        %s294 = smul.u32 2, %s293
        %s295 = sadd.s32 %s27, %s28
        %s296 = smul.u32 2, %s295
        %s297 = sadd.s32 %s27, %s28
        %s298 = smul.u32 2, %s297
        %s299 = smul.u32 8, %s27
        %p300 = scmp.eq.s32.totalorder %s28, 0
        // Predicated region
        $region45: #{tpu_custom_call.1} parent=31 // pred_check
          %p301 = pneg %p300
        $region46: #{tpu_custom_call.1} parent=31 // pred_check_branch
          %303 = sbr.rel (%p301) target = $region48
        $region47: #{tpu_custom_call.1} parent=31 // pred_region
          %304 = vst [vmem:[%s292] sm:$0xff] 0.0
          %305 = vst [vmem:[%s292 + $0x8] sm:$0xff] 0.0
          %306 = vst [vmem:[%s292 + $0x10] sm:$0xff] 0.0
          %307 = vst [vmem:[%s292 + $0x18] sm:$0xff] 0.0
          %308 = vst [vmem:[%s292 + $0x20] sm:$0xff] 0.0
          %309 = vst [vmem:[%s292 + $0x28] sm:$0xff] 0.0
          %310 = vst [vmem:[%s292 + $0x30] sm:$0xff] 0.0
          %311 = vst [vmem:[%s292 + $0x38] sm:$0xff] 0.0
        $region48: #{tpu_custom_call.1} parent=31 // pred_fallthru
          _
        %v312 = vld [vmem:[%s239] sm:$0xff]
        %v313 = vld [vmem:[%s239 + $0x8] sm:$0xff]
        %v314 = vld [vmem:[%s249] sm:$0xff]
        %v315 = vld [vmem:[%s249 + $0x8] sm:$0xff]
        %v316 = vld [vmem:[%s259] sm:$0xff]
        %v317 = vld [vmem:[%s259 + $0x8] sm:$0xff]
        %v318 = vsub.f32 %v312, %v316
        %v319 = vsub.f32 %v313, %v317
        %v320 = vsub.f32 %v314, %v316
        %v321 = vsub.f32 %v315, %v317
        %v322 = vand.u32 2147483647, %v318
        %v323 = vand.u32 2147483647, %v319
        %v324 = vmul.f32 %v318, %v318
        %v325 = vmul.f32 %v319, %v319
        %v326 = vmin.f32 %v312, 0.0
        %v327 = vmin.f32 %v313, 0.0
        %v328 = vand.u32 2147483647, %v320
        %v329 = vand.u32 2147483647, %v321
        %v330 = vmul.f32 %v320, %v320
        %v331 = vmul.f32 %v321, %v321
        %v332 = vmin.f32 %v314, 0.0
        %v333 = vmin.f32 %v315, 0.0
        %v334 = vld [vmem:[%s292] sm:$0xff]
        %v335 = vadd.f32 %v322, %v323
        %v336 = vadd.f32 %v334, %v335
        %337 = vst [vmem:[%s292] sm:$0xff] %v336
        %v338 = vld [vmem:[%s292 + $0x8] sm:$0xff]
        %v339 = vadd.f32 %v318, %v319
        %v340 = vadd.f32 %v338, %v339
        %341 = vst [vmem:[%s292 + $0x8] sm:$0xff] %v340
        %v342 = vld [vmem:[%s292 + $0x10] sm:$0xff]
        %v343 = vadd.f32 %v324, %v325
        %v344 = vadd.f32 %v342, %v343
        %345 = vst [vmem:[%s292 + $0x10] sm:$0xff] %v344
        %v346 = vld [vmem:[%s292 + $0x18] sm:$0xff]
        %v347 = vadd.f32 %v326, %v327
        %v348 = vadd.f32 %v346, %v347
        %349 = vst [vmem:[%s292 + $0x18] sm:$0xff] %v348
        %v350 = vld [vmem:[%s292 + $0x20] sm:$0xff]
        %v351 = vadd.f32 %v328, %v329
        %v352 = vadd.f32 %v350, %v351
        %353 = vst [vmem:[%s292 + $0x20] sm:$0xff] %v352
        %v354 = vld [vmem:[%s292 + $0x28] sm:$0xff]
        %v355 = vadd.f32 %v320, %v321
        %v356 = vadd.f32 %v354, %v355
        %357 = vst [vmem:[%s292 + $0x28] sm:$0xff] %v356
        %v358 = vld [vmem:[%s292 + $0x30] sm:$0xff]
        %v359 = vadd.f32 %v330, %v331
        %v360 = vadd.f32 %v358, %v359
        %361 = vst [vmem:[%s292 + $0x30] sm:$0xff] %v360
        %v362 = vld [vmem:[%s292 + $0x38] sm:$0xff]
        %v363 = vadd.f32 %v332, %v333
        %v364 = vadd.f32 %v362, %v363
        %365 = vst [vmem:[%s292 + $0x38] sm:$0xff] %v364
        %s366 = sand.u32 %s127, 1
        %s367 = scalar_lea.sflag [#allocation4], %s366
        %s368 = sand.u32 %s127, 1
        %s369 = smul.addr %s368, 64
        %s370 = scalar_lea.vmem [#allocation8], %s369
        // Predicated region
        $region49: #{tpu_custom_call.1} parent=31 // pred_check
          %p371 = pneg %p137
        $region50: #{tpu_custom_call.1} parent=31 // pred_check_branch
          %373 = sbr.rel (%p371) target = $region52
        $region51: #{tpu_custom_call.1} parent=31 // pred_region
          %s374 = smul.u32 8, %s27
          %376 = vsyncadd %s367, 0
          %s377 = smul.addr %s374, 8
          %s378 = scalar_lea.hbm %s3, %s377
          %s379 = sshll.u32 %s370, 4
          %s380 = int_to_ptr.vmem [resolvable:$true] %s379
          %s381 = sshll.u32 %s378, 4
          %s382 = int_to_ptr.hbm [resolvable:$true] %s381
          %387 = dma.vmem_to_hbm [thread:$0]  %s380, 1024, %s382, %s367, 128, 128, 8
        $region52: #{tpu_custom_call.1} parent=31 // pred_fallthru
          _
      $region32: #{tpu_custom_call.1} parent=5 // pred_fallthru
        _
      %p388 = scmp.le.s32.totalorder 2, %s18
      // Predicated region
      $region53: #{tpu_custom_call.1} parent=5 // pred_check
        %p389 = pneg %p388
      $region54: #{tpu_custom_call.1} parent=5 // pred_check_branch
        %391 = sbr.rel (%p389) target = $region56
      $region55: #{tpu_custom_call.1} parent=5 // pred_region
        %s392 = ssub.s32 %s18, 2
        // Predicated region
        $region57: #{tpu_custom_call.1} parent=55 // pred_check
          %p393 = pneg %p143
        $region58: #{tpu_custom_call.1} parent=55 // pred_check_branch
          %395 = sbr.rel (%p393) target = $region60
        $region59: #{tpu_custom_call.1} parent=55 // pred_region
          %s396 = sand.u32 %s128, 1
          %s397 = scalar_lea.sflag [#allocation4], %s396
          %s398 = sand.u32 %s128, 1
          %s399 = smul.addr %s398, 64
          %s400 = scalar_lea.vmem [#allocation8], %s399
          %402 = dma.done %s397, 1024
        $region60: #{tpu_custom_call.1} parent=55 // pred_fallthru
          _
      $region56: #{tpu_custom_call.1} parent=5 // pred_fallthru
        _
    $region6: #{tpu_custom_call.1} parent=1 // loop_footer
      %s22 = sadd.s32 1, %s18
    $region7: #{tpu_custom_call.1} parent=1 // loop_footer_branch
      %17 = sbr.rel target = $region3
    $region8: #{tpu_custom_call.1} parent=1 // loop_exit
      _
    %403 = vsyncpa [#allocation3], 1
    %s404 = scalar_lea.sflag [#allocation3], 1
    %405 = vsyncpa %s404, 1
    %406 = vsyncpa [#allocation6], 1
    %s407 = scalar_lea.sflag [#allocation6], 1
    %408 = vsyncpa %s407, 1
    %409 = vsyncpa [#allocation4], 1
    %s410 = scalar_lea.sflag [#allocation4], 1
    %411 = vsyncpa %s410, 1

</llo_original>
